<compile_context>
chip_gen: v5e
topology: v5e:2x2
jax: 0.10.0
libtpu: 0.0.40
codegen_flags: <defaults>
</compile_context>

<pallas_src>
import functools

import jax
import jax.numpy as jnp
from jax.experimental import pallas as pl
from jax.experimental.pallas import tpu as pltpu

_LANES = 128
_BATCH_TILE_CAP = 2048          # keeps the sublane-padded (b_tile, 1) scale block small
_BLOCK_BUDGET_BYTES = 4 << 20   # ~4 MiB payload / block: >=85% of HBM roofline,
                                # and safe on v7x (64 MiB physical VMEM).


def _sublane_multiple(dtype):
    # Sub-32-bit dtypes pack along sublanes: native second-minor tiling is
    # 8 (f32) / 16 (bf16, f16) / 32 (int8, fp8).
    return {4: 8, 2: 16, 1: 32}.get(jnp.dtype(dtype).itemsize, 8)


def _round_up(x, m):
    return -(-x // m) * m


def _choose_tiles(B, F, dtype):
    """Pick (b_tile, f_tile) for the (B, F) view: dense, ~4 MiB, legal blocks."""
    itemsize = jnp.dtype(dtype).itemsize
    sub = _sublane_multiple(dtype)
    budget = max(sub * _LANES, _BLOCK_BUDGET_BYTES // itemsize)  # elements / block

    # Feature tile: full F when it fits next to a minimal batch tile (legal for
    # any F), otherwise a large multiple of 128 (last block along F is masked).
    b_min = max(1, min(B, sub))
    f_cap = max(_LANES, (budget // b_min) // _LANES * _LANES)
    f_tile = F if F <= f_cap else f_cap

    # Batch tile: fill the remaining budget; either the full batch or a multiple
    # of the dtype's sublane packing (keeps tiles natively packed / unmasked).
    b_cap = max(1, budget // max(f_tile, 1))
    if b_cap >= B:
        b_tile = B
    else:
        b_tile = max(sub, (b_cap // sub) * sub)
    b_tile = min(b_tile, B, _BATCH_TILE_CAP)

    # Megacore (v7x has 2 TensorCores): ensure >= 2 parallel blocks whenever the
    # tensor is large enough for the second core to matter.
    if pl.cdiv(B, b_tile) * pl.cdiv(F, f_tile) < 2 and F >= 2 * _LANES:
        f_tile = max(_LANES, _round_up(pl.cdiv(F, 2), _LANES))

    return b_tile, f_tile


def _drop_path_kernel(scale_ref, x_ref, o_ref):
    # scale_ref: (b_tile, 1) f32 -- 0.0 for dropped samples, 1/keep_prob otherwise.
    # x_ref / o_ref: (b_tile, f_tile) tiles of the (B, F)-viewed tensor.
    s = scale_ref[...]                                 # resident across feature tiles
    prod = x_ref[...].astype(jnp.float32) * s          # f32 math; cast product once
    # masked_fill semantics: dropped rows are exactly zero even if x has NaN/Inf.
    o_ref[...] = jnp.where(s == 0.0, jnp.float32(0.0), prod).astype(o_ref.dtype)


@functools.partial(jax.jit, static_argnames=("p", "training"))
def drop_path(x, key, *, p=0.2, training=True):
    """DropPath forward. x: (B, ...) e.g. NCHW."""
    assert 0.0 <= p <= 1.0, "drop probability has to be between 0 and 1"
    if (not training) or p == 0.0:
        return x

    orig_shape = x.shape
    B = int(orig_shape[0])
    F = 1
    for d in orig_shape[1:]:
        F *= int(d)
    keep_prob = 1.0 - p

    # Per-sample Bernoulli draw (tiny; plain JAX). torch rule: drop iff rand > keep_prob.
    u = jax.random.uniform(key, (B,), dtype=jnp.float32)
    inv_keep = jnp.float32(1.0) / jnp.float32(keep_prob)      # inf if p == 1, like torch
    scale = jnp.where(u > keep_prob, jnp.float32(0.0), inv_keep).reshape(B, 1)

    xf = x.reshape(B, F)  # free view of a contiguous tensor: no extra HBM pass

    itemsize = jnp.dtype(x.dtype).itemsize
    b_tile, f_tile = _choose_tiles(B, F, x.dtype)
    grid = (pl.cdiv(B, b_tile), pl.cdiv(F, f_tile))

    block_bytes = b_tile * f_tile * itemsize
    # (b_tile, 1) f32 scale block, padded to (8, 128) f32 tiles in VMEM.
    scale_block_bytes = -(-b_tile // 8) * 8 * _LANES * 4
    # in + out double-buffered, scale double-buffered, plus compiler slack.
    vmem_limit = int(4 * block_bytes + 2 * scale_block_bytes + (8 << 20))

    # TODO(synk): optionally skip the input DMA for dropped samples via a
    # keep-mask-aware index_map (~p/2 less HBM read traffic); left out to keep
    # block indexing simple and avoid stale-VMEM hazards.
    out = pl.pallas_call(
        _drop_path_kernel,
        out_shape=jax.ShapeDtypeStruct((B, F), x.dtype),
        grid=grid,
        in_specs=[
            pl.BlockSpec((b_tile, 1), lambda i, j: (i, 0)),        # per-sample scale
            pl.BlockSpec((b_tile, f_tile), lambda i, j: (i, j)),   # x tile
        ],
        out_specs=pl.BlockSpec((b_tile, f_tile), lambda i, j: (i, j)),
        compiler_params=pltpu.CompilerParams(
            dimension_semantics=("parallel", "parallel"),
            vmem_limit_bytes=vmem_limit,
        ),
    )(scale, xf)

    return out.reshape(orig_shape)


if __name__ == "__main__":
    root = jax.random.PRNGKey(0)
    kx, kdrop = jax.random.split(root)

    p = 0.2
    keep_prob = 1.0 - p

    # NCHW input, as the original module implies.
    B, C, H, W = 2, 4, 16, 16
    x = jax.random.normal(kx, (B, C, H, W), dtype=jnp.float32)

    y = jax.block_until_ready(drop_path(x, kdrop, p=p, training=True))

    # Pure-JAX reference with the same RNG draw / drop rule.
    u = jax.random.uniform(kdrop, (B,), dtype=jnp.float32)
    scale_ref = jnp.where(u > keep_prob, 0.0, 1.0 / keep_prob).reshape(B, 1, 1, 1)
    assert jnp.allclose(y, x * scale_ref, atol=1e-6), "mismatch vs reference (train)"

    # Eval mode / p == 0 -> identity.
    y_eval = jax.block_until_ready(drop_path(x, kdrop, p=p, training=False))
    assert jnp.allclose(y_eval, x), "mismatch (eval identity)"

    # Ragged feature count (F % 128 != 0): handled in-kernel, no padding pass.
    x2 = jax.random.normal(kx, (2, 3, 5, 7), dtype=jnp.float32)
    y2 = jax.block_until_ready(drop_path(x2, kdrop, p=p, training=True))
    u2 = jax.random.uniform(kdrop, (2,), dtype=jnp.float32)
    s2 = jnp.where(u2 > keep_prob, 0.0, 1.0 / keep_prob).reshape(2, 1, 1, 1)
    assert jnp.allclose(y2, x2 * s2, atol=1e-6), "mismatch vs reference (ragged F)"

    # bf16 input exercises the dtype-aware sublane tiling and the f32 math path.
    x3 = jax.random.normal(kx, (4, 8, 8, 8), dtype=jnp.bfloat16)
    y3 = jax.block_until_ready(drop_path(x3, kdrop, p=p, training=True))
    u3 = jax.random.uniform(kdrop, (4,), dtype=jnp.float32)
    s3 = jnp.where(u3 > keep_prob, 0.0, 1.0 / keep_prob).reshape(4, 1, 1, 1)
    y3_ref = (x3.astype(jnp.float32) * s3).astype(jnp.bfloat16)
    assert jnp.allclose(y3.astype(jnp.float32), y3_ref.astype(jnp.float32),
                        atol=1e-2, rtol=1e-2), "mismatch vs reference (bf16)"

    print("KERNEL_OK")
</pallas_src>

<mosaic_0001>
module attributes {stable_mosaic.version = 11 : i64} {
  func.func @_drop_path_kernel(%arg0: i32, %arg1: i32, %arg2: memref<2x1xf32, #tpu.memory_space<vmem>>, %arg3: memref<2x512xf32, #tpu.memory_space<vmem>>, %arg4: memref<2x512xf32, #tpu.memory_space<vmem>>) attributes {dimension_semantics = [#tpu.dimension_semantics<parallel>, #tpu.dimension_semantics<parallel>], iteration_bounds = array<i64: 1, 2>, scalar_prefetch = 0 : i64, scratch_operands = 0 : i64, tpu.core_type = #tpu.core_type<tc>, window_params = [{transform_indices = @transform_0, window_bounds = array<i64: 2, 1>}, {transform_indices = @transform_1, window_bounds = array<i64: 2, 512>}, {transform_indices = @transform_2, window_bounds = array<i64: 2, 512>}]} {
    %c0 = arith.constant 0 : index
    %c0_0 = arith.constant 0 : index
    %0 = vector.load %arg2[%c0, %c0_0] : memref<2x1xf32, #tpu.memory_space<vmem>>, vector<2x1xf32>
    %c0_1 = arith.constant 0 : index
    %c0_2 = arith.constant 0 : index
    %1 = vector.load %arg3[%c0_1, %c0_2] : memref<2x512xf32, #tpu.memory_space<vmem>>, vector<2x512xf32>
    %2 = vector.broadcast %0 : vector<2x1xf32> to vector<2x512xf32>
    %3 = arith.mulf %1, %2 : vector<2x512xf32>
    %cst = arith.constant 0.000000e+00 : f32
    %4 = vector.broadcast %cst : f32 to vector<2x1xf32>
    %5 = arith.cmpf oeq, %0, %4 : vector<2x1xf32>
    %cst_3 = arith.constant 0.000000e+00 : f32
    %6 = vector.shape_cast %5 : vector<2x1xi1> to vector<2x1xi1>
    %7 = vector.broadcast %6 : vector<2x1xi1> to vector<2x512xi1>
    %8 = vector.broadcast %cst_3 : f32 to vector<2x512xf32>
    %9 = arith.select %7, %8, %3 : vector<2x512xi1>, vector<2x512xf32>
    %c0_4 = arith.constant 0 : index
    %c0_5 = arith.constant 0 : index
    %10 = vector.load %arg4[%c0_4, %c0_5] : memref<2x512xf32, #tpu.memory_space<vmem>>, vector<2x512xf32>
    tpu.vector_store %arg4[%c0_4, %c0_5], %9 {strides = array<i32>} : memref<2x512xf32, #tpu.memory_space<vmem>>, vector<2x512xf32>,
    return
  }
  func.func @transform_0(%arg0: i32, %arg1: i32) -> (i32, i32) {
    %c0_i32 = arith.constant 0 : i32
    %c0_i32_0 = arith.constant 0 : i32
    return %arg0, %c0_i32 : i32, i32
  }
  func.func @transform_1(%arg0: i32, %arg1: i32) -> (i32, i32) {
    %c0_i32 = arith.constant 0 : i32
    return %arg0, %arg1 : i32, i32
  }
  func.func @transform_2(%arg0: i32, %arg1: i32) -> (i32, i32) {
    %c0_i32 = arith.constant 0 : i32
    return %arg0, %arg1 : i32, i32
  }
}

</mosaic_0001>

<llo_original>
// kernel: drop_path.1
$region0: #{drop_path.1}
  #allocation0 [shape = 'u32[]', space=smem, size = 0x4, offset = 0x4, fixed_abs, tag = 'smem constant byte address 0x4 - core index']
  #allocation1 [shape = 'u32[72,128]{1,0:T(1,128)}', space=vmem, size = 0x9000, scoped, tag = 'internal scratch']
  %s0 = inlined_call_operand.vmem [shape: f32[2,1], index: 0, kind: input, shape index: {}]
  %s1 = inlined_call_operand.vmem [shape: f32[2,1024], index: 1, kind: input, shape index: {}]
  %s2 = inlined_call_operand.vmem [shape: f32[2,1024], index: 2, kind: output, shape index: {}]
  %s3 = sld [smem:[#allocation0]]
  $region41: #{drop_path.1} parent=0
    _
  %s5 = ssub.s32 1, %s3
  %s6 = scalar_select 0, %s5, %s3
  loop: start=0, step=1, limit=4
  $region2: #{drop_path.1} parent=0 // loop_pre_header
    _
  $region3: #{drop_path.1} parent=0 // loop_header
    %s8 = sphi 0, %s12
    %p9 = scmp.ge.s32.totalorder %s8, 4
    %s15 = sphi 0, %s27
    %s16 = sphi 0, %s23
    %s17 = sphi 0, %s15
    %s18 = sphi 0, %s16
    %s19 = sphi 0, %s17
    %s20 = sphi 0, %s18
    %s30 = sphi 0, %s32
    %s33 = sphi 0, %s30
    %s34 = sphi 0, %s33
    %s50 = sphi 0, %s34
    %s58 = sphi 0, %s60
    %s61 = sphi 0, %s58
    %s62 = sphi 0, %s61
    %s78 = sphi 0, %s62
    %s86 = sphi 0, %s88
    %s89 = sphi 0, %s86
    %s90 = sphi 0, %s89
    %s106 = sphi 0, %s90
  $region4: #{drop_path.1} parent=0 // loop_header_branch
    %11 = sbr.rel (%p9) target = $region8
  $region5: #{drop_path.1} parent=0 // loop_body
    %s13 = ssub.s32 %s8, 1
    %s14 = ssub.s32 %s8, 2
    %s21 = sadd.s32 1, %s16
    %p22 = scmp.ge.s32.totalorder %s21, 2
    %s23 = scalar_select %p22, 0, %s21
    %s24 = sadd.s32 1, %s15
    %s25 = scalar_select %p22, %s24, %s15
    %p26 = scmp.ge.s32.totalorder %s25, 1
    %s27 = scalar_select %p26, 0, %s25
    %s28 = ssub.s32 %s15, %s27
    %p29 = scmp.eq.s32.totalorder %s28, 0
    %s31 = sadd.s32 %s30, 1
    %s32 = scalar_select %p29, %s30, %s31
    %p35 = pneg %p29
    %p36 = scmp.eq.s32.totalorder %s8, 1
    %p37 = por %p35, %p36
    %p38 = scmp.ne.s32.totalorder %s30, %s33
    %p39 = scmp.eq.s32.totalorder %s8, 0
    %p40 = por %p38, %p39
    %p41 = scmp.ne.s32.totalorder %s30, %s33
    %p42 = scmp.eq.s32.totalorder %s13, 1
    %p43 = por %p41, %p42
    %p44 = scmp.ne.s32.totalorder %s33, %s34
    %p45 = scmp.eq.s32.totalorder %s13, 0
    %p46 = por %p44, %p45
    %p47 = scmp.ne.s32.totalorder %s33, %s34
    %p48 = scmp.eq.s32.totalorder %s14, 1
    %p49 = por %p47, %p48
    %p51 = scmp.ne.s32.totalorder %s34, %s50
    %p52 = scmp.eq.s32.totalorder %s14, 0
    %p53 = por %p51, %p52
    %s54 = ssub.s32 %s15, %s27
    %s55 = ssub.s32 %s16, %s23
    %s56 = sor.u32 %s54, %s55
    %p57 = scmp.eq.s32.totalorder %s56, 0
    %s59 = sadd.s32 %s58, 1
    %s60 = scalar_select %p57, %s58, %s59
    %p63 = pneg %p57
    %p64 = scmp.eq.s32.totalorder %s8, 1
    %p65 = por %p63, %p64
    %p66 = scmp.ne.s32.totalorder %s58, %s61
    %p67 = scmp.eq.s32.totalorder %s8, 0
    %p68 = por %p66, %p67
    %p69 = scmp.ne.s32.totalorder %s58, %s61
    %p70 = scmp.eq.s32.totalorder %s13, 1
    %p71 = por %p69, %p70
    %p72 = scmp.ne.s32.totalorder %s61, %s62
    %p73 = scmp.eq.s32.totalorder %s13, 0
    %p74 = por %p72, %p73
    %p75 = scmp.ne.s32.totalorder %s61, %s62
    %p76 = scmp.eq.s32.totalorder %s14, 1
    %p77 = por %p75, %p76
    %p79 = scmp.ne.s32.totalorder %s62, %s78
    %p80 = scmp.eq.s32.totalorder %s14, 0
    %p81 = por %p79, %p80
    %s82 = ssub.s32 %s15, %s27
    %s83 = ssub.s32 %s16, %s23
    %s84 = sor.u32 %s82, %s83
    %p85 = scmp.eq.s32.totalorder %s84, 0
    %s87 = sadd.s32 %s86, 1
    %s88 = scalar_select %p85, %s86, %s87
    %p91 = pneg %p85
    %p92 = scmp.eq.s32.totalorder %s8, 1
    %p93 = por %p91, %p92
    %p94 = scmp.ne.s32.totalorder %s86, %s89
    %p95 = scmp.eq.s32.totalorder %s8, 0
    %p96 = por %p94, %p95
    %p97 = scmp.ne.s32.totalorder %s86, %s89
    %p98 = scmp.eq.s32.totalorder %s13, 1
    %p99 = por %p97, %p98
    %p100 = scmp.ne.s32.totalorder %s89, %s90
    %p101 = scmp.eq.s32.totalorder %s13, 0
    %p102 = por %p100, %p101
    %p103 = scmp.ne.s32.totalorder %s89, %s90
    %p104 = scmp.eq.s32.totalorder %s14, 1
    %p105 = por %p103, %p104
    %p107 = scmp.ne.s32.totalorder %s90, %s106
    %p108 = scmp.eq.s32.totalorder %s14, 0
    %p109 = por %p107, %p108
    %p110 = scmp.le.s32.totalorder 1, %s8
    %p111 = scmp.lt.s32.totalorder %s8, 3
    %p112 = pnand %p110, %p111
    %p113 = pneg %p112
    // Predicated region
    $region9: #{drop_path.1} parent=5 // pred_check
      _
    $region10: #{drop_path.1} parent=5 // pred_check_branch
      %115 = sbr.rel (%p112) target = $region12
    $region11: #{drop_path.1} parent=5 // pred_region
      %s116 = ssub.s32 %s8, 1
      // Predicated region
      $region13: #{drop_path.1} parent=11 // pred_check
        %p117 = pneg %p46
      $region14: #{drop_path.1} parent=11 // pred_check_branch
        %119 = sbr.rel (%p117) target = $region16
      $region15: #{drop_path.1} parent=11 // pred_region
        %p120 = scmp.lt.s32.totalorder %s17, 0
        %s121 = scalar_select %p120, %s17, 0
        %s122 = smul.addr %s121, 2
        %s123 = scalar_lea.vmem %s0, %s122
      $region16: #{drop_path.1} parent=11 // pred_fallthru
        _
    $region12: #{drop_path.1} parent=5 // pred_fallthru
      _
    %p124 = scmp.lt.s32.totalorder %s8, 2
    // Predicated region
    $region17: #{drop_path.1} parent=5 // pred_check
      %p125 = pneg %p124
    $region18: #{drop_path.1} parent=5 // pred_check_branch
      %127 = sbr.rel (%p125) target = $region20
    $region19: #{drop_path.1} parent=5 // pred_region
      // Predicated region
      $region21: #{drop_path.1} parent=19 // pred_check
        %p128 = pneg %p68
      $region22: #{drop_path.1} parent=19 // pred_check_branch
        %130 = sbr.rel (%p128) target = $region24
      $region23: #{drop_path.1} parent=19 // pred_region
        %s131 = smul.u32 4, %s16
        %p132 = scmp.lt.s32.totalorder %s15, 0
        %s133 = scalar_select %p132, %s15, 0
        %p134 = scmp.lt.s32.totalorder %s131, 7
        %s135 = scalar_select %p134, %s131, 7
        %s136 = smul.addr %s133, 8
        %s137 = sadd.s32 %s135, %s136
        %s138 = smul.addr %s137, 2
        %s139 = scalar_lea.vmem %s1, %s138
        %s140 = smul.u32 4, %s16
      $region24: #{drop_path.1} parent=19 // pred_fallthru
        _
    $region20: #{drop_path.1} parent=5 // pred_fallthru
      _
    %p141 = scmp.le.s32.totalorder 1, %s8
    %p142 = scmp.lt.s32.totalorder %s8, 3
    %p143 = pnand %p141, %p142
    %p144 = pneg %p143
    // Predicated region
    $region25: #{drop_path.1} parent=5 // pred_check
      _
    $region26: #{drop_path.1} parent=5 // pred_check_branch
      %146 = sbr.rel (%p143) target = $region28
    $region27: #{drop_path.1} parent=5 // pred_region
      %s147 = ssub.s32 %s8, 1
      %p148 = scmp.lt.s32.totalorder %s17, 0
      %s149 = scalar_select %p148, %s17, 0
      %s150 = smul.addr %s149, 2
      %s151 = scalar_lea.vmem %s0, %s150
      %p152 = pneg %p46
      %p153 = pneg %p43
      %s154 = smul.u32 4, %s18
      %p155 = scmp.lt.s32.totalorder %s17, 0
      %s156 = scalar_select %p155, %s17, 0
      %p157 = scmp.lt.s32.totalorder %s154, 7
      %s158 = scalar_select %p157, %s154, 7
      %s159 = smul.addr %s156, 8
      %s160 = sadd.s32 %s158, %s159
      %s161 = smul.addr %s160, 2
      %s162 = scalar_lea.vmem %s1, %s161
      %p163 = pneg %p74
      %p164 = pneg %p71
      %p165 = pneg %p102
      %p166 = pneg %p99
      %s167 = smul.u32 4, %s18
      %p168 = scmp.lt.s32.totalorder %s17, 0
      %s169 = scalar_select %p168, %s17, 0
      %p170 = scmp.lt.s32.totalorder %s167, 7
      %s171 = scalar_select %p170, %s167, 7
      %s172 = smul.addr %s169, 8
      %s173 = sadd.s32 %s171, %s172
      %s174 = smul.addr %s173, 2
      %s175 = scalar_lea.vmem %s2, %s174
      %p176 = scmp.lt.s32.totalorder %s17, 0
      %s177 = scalar_select %p176, %s17, 0
      %s178 = smul.addr %s177, 2
      %s179 = scalar_lea.vmem %s0, %s178
      %s180 = smul.u32 4, %s18
      %p181 = scmp.lt.s32.totalorder %s17, 0
      %s182 = scalar_select %p181, %s17, 0
      %p183 = scmp.lt.s32.totalorder %s180, 7
      %s184 = scalar_select %p183, %s180, 7
      %s185 = smul.addr %s182, 8
      %s186 = sadd.s32 %s184, %s185
      %s187 = smul.addr %s186, 2
      %s188 = scalar_lea.vmem %s1, %s187
      %s189 = smul.u32 4, %s18
      %s190 = smul.u32 4, %s18
      %p191 = scmp.lt.s32.totalorder %s17, 0
      %s192 = scalar_select %p191, %s17, 0
      %p193 = scmp.lt.s32.totalorder %s190, 7
      %s194 = scalar_select %p193, %s190, 7
      %s195 = smul.addr %s192, 8
      %s196 = sadd.s32 %s194, %s195
      %s197 = smul.addr %s196, 2
      %s198 = scalar_lea.vmem %s2, %s197
      %s199 = smul.u32 4, %s18
      %v200 = vld [vmem:[%s179] sm:$0x3]
      %v201 = vld [vmem:[%s188] sm:$0xff]
      %203 = vset.pattern.permute.xlu0 0
      %204 = vperm.xlu0 %203, %v200
      %v205 = vpop.permute.xlu0 %204
      %v207 = vunpack.c.l.s4 269488144
      %v208 = vunpack.c.0.s8 %v207
      %v209 = vperm.slane %v205, %v208
      %v211 = vmul.f32 %v201, %v209
      %vm212 = vcmp.eq.f32.partialorder %v200, 0.0
      %v213 = vsel %vm212, 1, 0
      %214 = vset.pattern.permute.xlu0 0
      %215 = vperm.xlu0 %214, %v213
      %v216 = vpop.permute.xlu0 %215
      %vm217 = vcmp.eq.s32.totalorder %v216, 1
      %219 = vst [vmem:[#allocation1] ss:$4 sm:$0xff] %v211
      %v220 = vld.sshfl [vmem:[#allocation1] sm:$0xff pattern:$0x73625140]
      %v221 = vld.sshfl [vmem:[#allocation1 + $0x8] sm:$0xff pattern:$0x73625140]
      %v222 = vld.sshfl [vmem:[#allocation1 + $0x10] sm:$0xff pattern:$0x73625140]
      %v223 = vld.sshfl [vmem:[#allocation1 + $0x18] sm:$0xff pattern:$0x73625140]
      %v228 = vsel %vm217, 0.0, %v220
      %v229 = vsel %vm217, 0.0, %v221
      %v230 = vsel %vm217, 0.0, %v222
      %v231 = vsel %vm217, 0.0, %v223
      %v236 = vrot.slane %v229, 6
      %v237 = vrot.slane %v230, 4
      %v238 = vrot.slane %v231, 2
      %vm239 = vcmask 1041408
      %v240 = vsel %vm239, %v228, %v236
      %vm241 = vcmask 1045508
      %v242 = vsel %vm241, %v237, %v238
      %vm243 = vcmask 1043456
      %v244 = vsel %vm243, %v240, %v242
      %246 = vst [vmem:[%s198] sm:$0xff] %v244
      %s247 = smul.u32 4, %s18
      %p248 = scmp.lt.s32.totalorder %s17, 0
      %s249 = scalar_select %p248, %s17, 0
      %p250 = scmp.lt.s32.totalorder %s247, 7
      %s251 = scalar_select %p250, %s247, 7
      %s252 = smul.addr %s249, 8
      %s253 = sadd.s32 %s251, %s252
      %s254 = smul.addr %s253, 2
      %s255 = scalar_lea.vmem %s2, %s254
      // Predicated region
      $region29: #{drop_path.1} parent=27 // pred_check
        %p256 = pneg %p99
      $region30: #{drop_path.1} parent=27 // pred_check_branch
        %258 = sbr.rel (%p256) target = $region32
      $region31: #{drop_path.1} parent=27 // pred_region
        %s259 = smul.u32 4, %s18
      $region32: #{drop_path.1} parent=27 // pred_fallthru
        _
    $region28: #{drop_path.1} parent=5 // pred_fallthru
      _
    %p260 = scmp.le.s32.totalorder 2, %s8
    // Predicated region
    $region33: #{drop_path.1} parent=5 // pred_check
      %p261 = pneg %p260
    $region34: #{drop_path.1} parent=5 // pred_check_branch
      %263 = sbr.rel (%p261) target = $region36
    $region35: #{drop_path.1} parent=5 // pred_region
      %s264 = ssub.s32 %s8, 2
      // Predicated region
      $region37: #{drop_path.1} parent=35 // pred_check
        %p265 = pneg %p105
      $region38: #{drop_path.1} parent=35 // pred_check_branch
        %267 = sbr.rel (%p265) target = $region40
      $region39: #{drop_path.1} parent=35 // pred_region
        %s268 = smul.u32 4, %s20
        %p269 = scmp.lt.s32.totalorder %s19, 0
        %s270 = scalar_select %p269, %s19, 0
        %p271 = scmp.lt.s32.totalorder %s268, 7
        %s272 = scalar_select %p271, %s268, 7
        %s273 = smul.addr %s270, 8
        %s274 = sadd.s32 %s272, %s273
        %s275 = smul.addr %s274, 2
        %s276 = scalar_lea.vmem %s2, %s275
      $region40: #{drop_path.1} parent=35 // pred_fallthru
        _
    $region36: #{drop_path.1} parent=5 // pred_fallthru
      _
  $region6: #{drop_path.1} parent=0 // loop_footer
    %s12 = sadd.s32 1, %s8
  $region7: #{drop_path.1} parent=0 // loop_footer_branch
    %7 = sbr.rel target = $region3
  $region8: #{drop_path.1} parent=0 // loop_exit
    _

</llo_original>
